<compile_context>
chip_gen: v6e
topology: v6e:2x2x1
jax: 0.10.0
libtpu: 0.0.40
codegen_flags: <defaults>
</compile_context>

<pallas_src>
from math import sqrt

import jax
import jax.numpy as jnp
from jax.experimental import pallas as pl
from jax.experimental.pallas import tpu as pltpu


def _round_up(x, m):
    return ((x + m - 1) // m) * m


def equalized_conv2d(x, weight, bias, *, padding=0):
    """Forward of StyleGAN's EqualizedConv2d (stride 1, groups 1, no dilation).

    x:      (N, C_in, H, W)
    weight: (C_out, C_in, KH, KW)   (the 'weight_origin' parameter)
    bias:   (C_out,)
    Returns conv2d(x, weight * sqrt(2 / fan_in), bias), stride 1.
    """
    N, C_in, H, W = x.shape
    C_out, C_in_w, KH, KW = weight.shape
    assert C_in_w == C_in
    # TODO(synk): stride != 1, dilation and groups of nn.Conv2d are not
    # supported by this kernel (StyleGAN uses the stride-1 defaults here).

    fan_in = C_in * KH * KW
    scale = sqrt(2.0 / fan_in)

    H_pad, W_pad = H + 2 * padding, W + 2 * padding
    H_out, W_out = H_pad - KH + 1, W_pad - KW + 1

    # Lane-dense wide output row length (multiple of 128 -> unmasked vst).
    L_out = _round_up(H_out * W_pad, 128)
    # Flattened-input length must cover the largest shifted slice; express it
    # as whole padded rows so a SINGLE jnp.pad produces the final layout.
    L_need = (KH - 1) * W_pad + (KW - 1) + L_out
    rows_total = -(-L_need // W_pad)              # ceil
    L_in = rows_total * W_pad                     # full last dim of x_flat
    bot_pad = rows_total - H - padding            # >= padding by construction

    K_flat = KH * KW * C_in                       # contraction depth = fan_in

    # ---- wrapper-side layout prep (one pad pass over x, tiny weight pass) ----
    x_pad = jnp.pad(x, ((0, 0), (0, 0), (padding, bot_pad), (padding, padding)))
    x_flat = x_pad.reshape(N, C_in, L_in)
    # Fold the equalized-LR scale into the weights and reshape to
    # (C_out, KH*KW*C_in) with K ordered (tap, channel) to match the slab.
    w_mat = (jnp.transpose(weight, (0, 2, 3, 1)).reshape(C_out, K_flat)
             * scale).astype(x.dtype)
    b_col = bias.reshape(C_out, 1).astype(jnp.float32)

    # C_out tiling (second grid axis).
    TCo = C_out if C_out <= 256 else 256
    n_co = -(-C_out // TCo)

    def kernel(x_ref, w_ref, b_ref, o_ref, slab_ref):
        # x_ref:  (1, C_in, L_in)      w_ref: (TCo, K_flat)
        # b_ref:  (TCo, 1) f32         o_ref: (1, TCo, L_out)
        # slab_ref (VMEM scratch): (K_flat, L_out) im2col slab.
        co = pl.program_id(1)

        # Build the im2col slab once per image; reused for every C_out tile
        # (the co axis is "arbitrary", so co == 0 runs first for each n and
        # the scratch persists across grid steps on the same core).
        @pl.when(co == 0)
        def _build_slab():
            for i in range(KH):
                for j in range(KW):
                    t = i * KW + j
                    start = i * W_pad + j                  # static offset
                    x_sl = x_ref[0, :, start:start + L_out]
                    slab_ref[t * C_in:(t + 1) * C_in, :] = x_sl

        # One MXU matmul with contraction K = fan_in, f32 accumulation.
        y = jnp.dot(w_ref[...], slab_ref[...],
                    preferred_element_type=jnp.float32)
        y = y + b_ref[...]                                 # (TCo,1) broadcast
        o_ref[0] = y.astype(o_ref.dtype)

    # ---- VMEM budget (generation-aware) ----
    itemsize = jnp.dtype(x.dtype).itemsize
    resident = (2 * C_in * L_in * itemsize        # x block (double-buffered)
                + 2 * TCo * K_flat * itemsize     # weight block
                + 2 * TCo * 4                     # bias block (f32)
                + 2 * TCo * L_out * itemsize      # out block
                + K_flat * L_out * itemsize       # im2col slab scratch
                + TCo * L_out * 4)                # f32 matmul/bias temp
    needed = int(1.5 * resident) + (8 << 20)
    try:
        vmem_cap = pltpu.get_tpu_info().vmem_capacity_bytes
    except Exception:
        vmem_cap = 64 * 2**20                     # v7x per-core lower bound
    vmem_limit = int(min(int(0.85 * vmem_cap), max(needed, 32 * 2**20)))
    # TODO(synk): very large layers (e.g. 256x256 with C >= 64) need a spatial
    # row-band grid axis (halo rows fetched via pl.ANY + make_async_copy) to
    # fit v7x's 64 MiB VMEM; not required at StyleGAN's small/medium sizes.

    out_bytes = N * C_out * L_out * itemsize
    out_wide = pl.pallas_call(
        kernel,
        out_shape=jax.ShapeDtypeStruct((N, C_out, L_out), x.dtype),
        grid_spec=pltpu.PrefetchScalarGridSpec(
            num_scalar_prefetch=0,
            grid=(N, n_co),
            in_specs=[
                pl.BlockSpec((1, C_in, L_in), lambda n, co: (n, 0, 0)),
                pl.BlockSpec((TCo, K_flat), lambda n, co: (co, 0)),
                pl.BlockSpec((TCo, 1), lambda n, co: (co, 0)),
            ],
            out_specs=pl.BlockSpec((1, TCo, L_out), lambda n, co: (n, co, 0)),
            scratch_shapes=[pltpu.VMEM((K_flat, L_out), x.dtype)],
        ),
        compiler_params=pltpu.CompilerParams(
            dimension_semantics=("parallel", "arbitrary"),
            vmem_limit_bytes=vmem_limit,
        ),
        cost_estimate=pl.CostEstimate(
            flops=2 * N * C_out * fan_in * H_out * W_out,
            transcendentals=0,
            bytes_accessed=(x_flat.size * itemsize
                            + w_mat.size * jnp.dtype(w_mat.dtype).itemsize
                            + b_col.size * 4
                            + out_bytes),
        ),
    )(x_flat, w_mat, b_col)

    # Crop the wide (lane-dense) layout back to the true conv output.
    # TODO(synk): consumers that accept the wide layout can skip this HBM pass.
    out = out_wide[:, :, :H_out * W_pad].reshape(N, C_out, H_out, W_pad)
    return out[:, :, :, :W_out]


if __name__ == "__main__":
    key = jax.random.PRNGKey(0)
    k_x, k_w, k_b = jax.random.split(key, 3)

    N, C_in, H, W = 2, 4, 16, 16
    C_out, KH, KW, padding = 8, 3, 3, 1

    x = jax.random.normal(k_x, (N, C_in, H, W), dtype=jnp.float32)
    # Module init: conv.weight.data.normal_(); conv.bias.data.zero_().
    # A non-zero bias is used here purely to exercise the bias-add path
    # (the forward math is identical for any parameter values).
    weight = jax.random.normal(k_w, (C_out, C_in, KH, KW), dtype=jnp.float32)
    bias = 0.1 * jax.random.normal(k_b, (C_out,), dtype=jnp.float32)

    y = equalized_conv2d(x, weight, bias, padding=padding)
    y = jax.block_until_ready(y)

    # Reference: plain XLA conv with the equalized-LR weight scaling.
    scale = sqrt(2.0 / (C_in * KH * KW))
    ref = jax.lax.conv_general_dilated(
        x, weight * scale, window_strides=(1, 1),
        padding=((padding, padding), (padding, padding)),
        dimension_numbers=("NCHW", "OIHW", "NCHW"),
    ) + bias.reshape(1, C_out, 1, 1)

    assert y.shape == ref.shape and y.dtype == x.dtype
    err = float(jnp.max(jnp.abs(y - ref)))
    assert jnp.allclose(y, ref, atol=1e-4, rtol=1e-4), err

    print("KERNEL_OK")
</pallas_src>

<mosaic_0001>
module attributes {stable_mosaic.version = 11 : i64} {
  func.func @kernel(%arg0: i32, %arg1: i32, %arg2: memref<1x4x432xf32, #tpu.memory_space<vmem>>, %arg3: memref<8x36xf32, #tpu.memory_space<vmem>>, %arg4: memref<8x1xf32, #tpu.memory_space<vmem>>, %arg5: memref<1x8x384xf32, #tpu.memory_space<vmem>>, %arg6: memref<36x384xf32, #tpu.memory_space<vmem>>) attributes {dimension_semantics = [#tpu.dimension_semantics<parallel>, #tpu.dimension_semantics<arbitrary>], iteration_bounds = array<i64: 2, 1>, scalar_prefetch = 0 : i64, scratch_operands = 1 : i64, tpu.core_type = #tpu.core_type<tc>, window_params = [{transform_indices = @transform_0, window_bounds = array<i64: 1, 4, 432>}, {transform_indices = @transform_1, window_bounds = array<i64: 8, 36>}, {transform_indices = @transform_2, window_bounds = array<i64: 8, 1>}, {transform_indices = @transform_3, window_bounds = array<i64: 1, 8, 384>}]} {
    %c0_i32 = arith.constant 0 : i32
    %0 = arith.cmpi eq, %arg1, %c0_i32 : i32
    %1 = arith.extui %0 : i1 to i32
    %c0_i32_0 = arith.constant 0 : i32
    %2 = arith.cmpi ne, %1, %c0_i32_0 : i32
    scf.if %2 {
      %c0_9 = arith.constant 0 : index
      %c0_10 = arith.constant 0 : index
      %c0_11 = arith.constant 0 : index
      %12 = vector.load %arg2[%c0_9, %c0_10, %c0_11] : memref<1x4x432xf32, #tpu.memory_space<vmem>>, vector<1x4x384xf32>
      %13 = vector.shape_cast %12 : vector<1x4x384xf32> to vector<4x384xf32>
      %c0_12 = arith.constant 0 : index
      %c0_13 = arith.constant 0 : index
      %14 = vector.load %arg6[%c0_12, %c0_13] : memref<36x384xf32, #tpu.memory_space<vmem>>, vector<4x384xf32>
      tpu.vector_store %arg6[%c0_12, %c0_13], %13 {strides = array<i32>} : memref<36x384xf32, #tpu.memory_space<vmem>>, vector<4x384xf32>,
      %c0_14 = arith.constant 0 : index
      %c0_15 = arith.constant 0 : index
      %c1 = arith.constant 1 : index
      %15 = vector.load %arg2[%c0_14, %c0_15, %c1] : memref<1x4x432xf32, #tpu.memory_space<vmem>>, vector<1x4x384xf32>
      %16 = vector.shape_cast %15 : vector<1x4x384xf32> to vector<4x384xf32>
      %c4 = arith.constant 4 : index
      %c0_16 = arith.constant 0 : index
      %17 = vector.load %arg6[%c4, %c0_16] : memref<36x384xf32, #tpu.memory_space<vmem>>, vector<4x384xf32>
      tpu.vector_store %arg6[%c4, %c0_16], %16 {strides = array<i32>} : memref<36x384xf32, #tpu.memory_space<vmem>>, vector<4x384xf32>,
      %c0_17 = arith.constant 0 : index
      %c0_18 = arith.constant 0 : index
      %c2 = arith.constant 2 : index
      %18 = vector.load %arg2[%c0_17, %c0_18, %c2] : memref<1x4x432xf32, #tpu.memory_space<vmem>>, vector<1x4x384xf32>
      %19 = vector.shape_cast %18 : vector<1x4x384xf32> to vector<4x384xf32>
      %c8 = arith.constant 8 : index
      %c0_19 = arith.constant 0 : index
      %20 = vector.load %arg6[%c8, %c0_19] : memref<36x384xf32, #tpu.memory_space<vmem>>, vector<4x384xf32>
      tpu.vector_store %arg6[%c8, %c0_19], %19 {strides = array<i32>} : memref<36x384xf32, #tpu.memory_space<vmem>>, vector<4x384xf32>,
      %c0_20 = arith.constant 0 : index
      %c0_21 = arith.constant 0 : index
      %c18 = arith.constant 18 : index
      %21 = vector.load %arg2[%c0_20, %c0_21, %c18] : memref<1x4x432xf32, #tpu.memory_space<vmem>>, vector<1x4x384xf32>
      %22 = vector.shape_cast %21 : vector<1x4x384xf32> to vector<4x384xf32>
      %c12 = arith.constant 12 : index
      %c0_22 = arith.constant 0 : index
      %23 = vector.load %arg6[%c12, %c0_22] : memref<36x384xf32, #tpu.memory_space<vmem>>, vector<4x384xf32>
      tpu.vector_store %arg6[%c12, %c0_22], %22 {strides = array<i32>} : memref<36x384xf32, #tpu.memory_space<vmem>>, vector<4x384xf32>,
      %c0_23 = arith.constant 0 : index
      %c0_24 = arith.constant 0 : index
      %c19 = arith.constant 19 : index
      %24 = vector.load %arg2[%c0_23, %c0_24, %c19] : memref<1x4x432xf32, #tpu.memory_space<vmem>>, vector<1x4x384xf32>
      %25 = vector.shape_cast %24 : vector<1x4x384xf32> to vector<4x384xf32>
      %c16 = arith.constant 16 : index
      %c0_25 = arith.constant 0 : index
      %26 = vector.load %arg6[%c16, %c0_25] : memref<36x384xf32, #tpu.memory_space<vmem>>, vector<4x384xf32>
      tpu.vector_store %arg6[%c16, %c0_25], %25 {strides = array<i32>} : memref<36x384xf32, #tpu.memory_space<vmem>>, vector<4x384xf32>,
      %c0_26 = arith.constant 0 : index
      %c0_27 = arith.constant 0 : index
      %c20 = arith.constant 20 : index
      %27 = vector.load %arg2[%c0_26, %c0_27, %c20] : memref<1x4x432xf32, #tpu.memory_space<vmem>>, vector<1x4x384xf32>
      %28 = vector.shape_cast %27 : vector<1x4x384xf32> to vector<4x384xf32>
      %c20_28 = arith.constant 20 : index
      %c0_29 = arith.constant 0 : index
      %29 = vector.load %arg6[%c20_28, %c0_29] : memref<36x384xf32, #tpu.memory_space<vmem>>, vector<4x384xf32>
      tpu.vector_store %arg6[%c20_28, %c0_29], %28 {strides = array<i32>} : memref<36x384xf32, #tpu.memory_space<vmem>>, vector<4x384xf32>,
      %c0_30 = arith.constant 0 : index
      %c0_31 = arith.constant 0 : index
      %c36 = arith.constant 36 : index
      %30 = vector.load %arg2[%c0_30, %c0_31, %c36] : memref<1x4x432xf32, #tpu.memory_space<vmem>>, vector<1x4x384xf32>
      %31 = vector.shape_cast %30 : vector<1x4x384xf32> to vector<4x384xf32>
      %c24 = arith.constant 24 : index
      %c0_32 = arith.constant 0 : index
      %32 = vector.load %arg6[%c24, %c0_32] : memref<36x384xf32, #tpu.memory_space<vmem>>, vector<4x384xf32>
      tpu.vector_store %arg6[%c24, %c0_32], %31 {strides = array<i32>} : memref<36x384xf32, #tpu.memory_space<vmem>>, vector<4x384xf32>,
      %c0_33 = arith.constant 0 : index
      %c0_34 = arith.constant 0 : index
      %c37 = arith.constant 37 : index
      %33 = vector.load %arg2[%c0_33, %c0_34, %c37] : memref<1x4x432xf32, #tpu.memory_space<vmem>>, vector<1x4x384xf32>
      %34 = vector.shape_cast %33 : vector<1x4x384xf32> to vector<4x384xf32>
      %c28 = arith.constant 28 : index
      %c0_35 = arith.constant 0 : index
      %35 = vector.load %arg6[%c28, %c0_35] : memref<36x384xf32, #tpu.memory_space<vmem>>, vector<4x384xf32>
      tpu.vector_store %arg6[%c28, %c0_35], %34 {strides = array<i32>} : memref<36x384xf32, #tpu.memory_space<vmem>>, vector<4x384xf32>,
      %c0_36 = arith.constant 0 : index
      %c0_37 = arith.constant 0 : index
      %c38 = arith.constant 38 : index
      %36 = vector.load %arg2[%c0_36, %c0_37, %c38] : memref<1x4x432xf32, #tpu.memory_space<vmem>>, vector<1x4x384xf32>
      %37 = vector.shape_cast %36 : vector<1x4x384xf32> to vector<4x384xf32>
      %c32 = arith.constant 32 : index
      %c0_38 = arith.constant 0 : index
      %38 = vector.load %arg6[%c32, %c0_38] : memref<36x384xf32, #tpu.memory_space<vmem>>, vector<4x384xf32>
      tpu.vector_store %arg6[%c32, %c0_38], %37 {strides = array<i32>} : memref<36x384xf32, #tpu.memory_space<vmem>>, vector<4x384xf32>,
    } else {
    }
    %c0 = arith.constant 0 : index
    %c0_1 = arith.constant 0 : index
    %3 = vector.load %arg3[%c0, %c0_1] : memref<8x36xf32, #tpu.memory_space<vmem>>, vector<8x36xf32>
    %c0_2 = arith.constant 0 : index
    %c0_3 = arith.constant 0 : index
    %4 = vector.load %arg6[%c0_2, %c0_3] : memref<36x384xf32, #tpu.memory_space<vmem>>, vector<36x384xf32>
    %cst = arith.constant dense<0.000000e+00> : vector<8x384xf32>
    %5 = tpu.matmul %3, %4, %cst {dimension_numbers = #tpu.dot_dimension_numbers<[1], [0], [0], [1], [0, 0, 1, 1], [], []>} : vector<8x36xf32>, vector<36x384xf32>, vector<8x384xf32> -> vector<8x384xf32>
    %c0_4 = arith.constant 0 : index
    %c0_5 = arith.constant 0 : index
    %6 = vector.load %arg4[%c0_4, %c0_5] : memref<8x1xf32, #tpu.memory_space<vmem>>, vector<8x1xf32>
    %7 = vector.broadcast %6 : vector<8x1xf32> to vector<8x384xf32>
    %8 = arith.addf %5, %7 : vector<8x384xf32>
    %c0_6 = arith.constant 0 : index
    %c0_7 = arith.constant 0 : index
    %c0_8 = arith.constant 0 : index
    %9 = vector.load %arg5[%c0_6, %c0_7, %c0_8] : memref<1x8x384xf32, #tpu.memory_space<vmem>>, vector<1x8x384xf32>
    %10 = vector.shape_cast %9 : vector<1x8x384xf32> to vector<8x384xf32>
    %11 = vector.shape_cast %8 : vector<8x384xf32> to vector<1x8x384xf32>
    tpu.vector_store %arg5[%c0_6, %c0_7, %c0_8], %11 {strides = array<i32>} : memref<1x8x384xf32, #tpu.memory_space<vmem>>, vector<1x8x384xf32>,
    return
  }
  func.func @transform_0(%arg0: i32, %arg1: i32) -> (i32, i32, i32) {
    %c0_i32 = arith.constant 0 : i32
    %c0_i32_0 = arith.constant 0 : i32
    %c0_i32_1 = arith.constant 0 : i32
    return %arg0, %c0_i32, %c0_i32_0 : i32, i32, i32
  }
  func.func @transform_1(%arg0: i32, %arg1: i32) -> (i32, i32) {
    %c0_i32 = arith.constant 0 : i32
    %c0_i32_0 = arith.constant 0 : i32
    return %arg1, %c0_i32 : i32, i32
  }
  func.func @transform_2(%arg0: i32, %arg1: i32) -> (i32, i32) {
    %c0_i32 = arith.constant 0 : i32
    %c0_i32_0 = arith.constant 0 : i32
    return %arg1, %c0_i32 : i32, i32
  }
  func.func @transform_3(%arg0: i32, %arg1: i32) -> (i32, i32, i32) {
    %c0_i32 = arith.constant 0 : i32
    %c0_i32_0 = arith.constant 0 : i32
    return %arg0, %arg1, %c0_i32 : i32, i32, i32
  }
}

</mosaic_0001>

<llo_original>
// kernel: tpu_custom_call.1
$region0: #{tpu_custom_call.1}
  #allocation0 [shape = 'u32[]', space=smem, size = 0x4, offset = 0x4, fixed_abs, tag = 'smem constant byte address 0x4 - core index']
  #allocation1 [shape = 'u32[144,128]{1,0:T(1,128)}', space=vmem, size = 0x12000, scoped, tag = 'internal scratch']
  #allocation2 [shape = 'f32[36,384]{1,0:T(8,128)}', space=vmem, size = 0xf000, scoped, tag = 'scratch operand']
  %s0 = inlined_call_operand.hbm [shape: f32[2,4,432], index: 0, kind: input, shape index: {}]
  %s1 = inlined_call_operand.vmem [shape: f32[8,36], index: 1, kind: input, shape index: {}]
  %s2 = inlined_call_operand.vmem [shape: f32[8,1], index: 2, kind: input, shape index: {}]
  %s3 = inlined_call_operand.hbm [shape: f32[2,8,384], index: 3, kind: output, shape index: {}]
  %s4 = sld [smem:[#allocation0]]
  $region53: #{tpu_custom_call.1} parent=0
    _
  %s6 = ssub.s32 1, %s4
  %s7 = scalar_select 0, %s6, %s4
  $region1: #{tpu_custom_call.1} parent=0
    #allocation3 [shape = 'u8[16384]{0}', space=vmem, size = 0x4000, scoped, tag = 'input window, operand 0']
    #allocation4 [shape = 's32[2]{0}', space=sflag, size = 0x8, scoped, tag = 'scoped memory for tpu_custom_call.1']
    #allocation5 [shape = 's32[2]{0}', space=sflag, size = 0x8, scoped, tag = 'scoped memory for tpu_custom_call.1']
    #allocation6 [shape = 'u8[24576]{0}', space=vmem, size = 0x6000, scoped, tag = 'output window, operand 0']
    %8 = vsyncpa [#allocation4], 0
    %s9 = scalar_lea.sflag [#allocation4], 1
    %10 = vsyncpa %s9, 0
    %11 = vsyncpa [#allocation5], 0
    %s12 = scalar_lea.sflag [#allocation5], 1
    %13 = vsyncpa %s12, 0
    loop: start=0, step=1, limit=4
    $region2: #{tpu_custom_call.1} parent=1 // loop_pre_header
      _
    $region3: #{tpu_custom_call.1} parent=1 // loop_header
      %s15 = sphi 0, %s19
      %p16 = scmp.ge.s32.totalorder %s15, 4
      %s22 = sphi 0, %s34
      %s23 = sphi 0, %s30
      %s24 = sphi 0, %s22
      %s25 = sphi 0, %s23
      %s26 = sphi 0, %s24
      %s27 = sphi 0, %s25
      %s37 = sphi 0, %s39
      %s40 = sphi 0, %s37
      %s41 = sphi 0, %s40
      %s57 = sphi 0, %s41
      %s63 = sphi 0, %s65
      %s66 = sphi 0, %s63
      %s67 = sphi 0, %s66
      %s83 = sphi 0, %s67
      %s89 = sphi 0, %s91
      %s92 = sphi 0, %s89
      %s93 = sphi 0, %s92
      %s109 = sphi 0, %s93
      %s117 = sphi 0, %s119
      %s120 = sphi 0, %s117
      %s121 = sphi 0, %s120
      %s137 = sphi 0, %s121
    $region4: #{tpu_custom_call.1} parent=1 // loop_header_branch
      %18 = sbr.rel (%p16) target = $region8
    $region5: #{tpu_custom_call.1} parent=1 // loop_body
      %s20 = ssub.s32 %s15, 1
      %s21 = ssub.s32 %s15, 2
      %s28 = sadd.s32 1, %s23
      %p29 = scmp.ge.s32.totalorder %s28, 1
      %s30 = scalar_select %p29, 0, %s28
      %s31 = sadd.s32 1, %s22
      %s32 = scalar_select %p29, %s31, %s22
      %p33 = scmp.ge.s32.totalorder %s32, 2
      %s34 = scalar_select %p33, 0, %s32
      %s35 = ssub.s32 %s22, %s34
      %p36 = scmp.eq.s32.totalorder %s35, 0
      %s38 = sadd.s32 %s37, 1
      %s39 = scalar_select %p36, %s37, %s38
      %p42 = pneg %p36
      %p43 = scmp.eq.s32.totalorder %s15, 1
      %p44 = por %p42, %p43
      %p45 = scmp.ne.s32.totalorder %s37, %s40
      %p46 = scmp.eq.s32.totalorder %s15, 0
      %p47 = por %p45, %p46
      %p48 = scmp.ne.s32.totalorder %s37, %s40
      %p49 = scmp.eq.s32.totalorder %s20, 1
      %p50 = por %p48, %p49
      %p51 = scmp.ne.s32.totalorder %s40, %s41
      %p52 = scmp.eq.s32.totalorder %s20, 0
      %p53 = por %p51, %p52
      %p54 = scmp.ne.s32.totalorder %s40, %s41
      %p55 = scmp.eq.s32.totalorder %s21, 1
      %p56 = por %p54, %p55
      %p58 = scmp.ne.s32.totalorder %s41, %s57
      %p59 = scmp.eq.s32.totalorder %s21, 0
      %p60 = por %p58, %p59
      %s61 = ssub.s32 %s23, %s30
      %p62 = scmp.eq.s32.totalorder %s61, 0
      %s64 = sadd.s32 %s63, 1
      %s65 = scalar_select %p62, %s63, %s64
      %p68 = pneg %p62
      %p69 = scmp.eq.s32.totalorder %s15, 1
      %p70 = por %p68, %p69
      %p71 = scmp.ne.s32.totalorder %s63, %s66
      %p72 = scmp.eq.s32.totalorder %s15, 0
      %p73 = por %p71, %p72
      %p74 = scmp.ne.s32.totalorder %s63, %s66
      %p75 = scmp.eq.s32.totalorder %s20, 1
      %p76 = por %p74, %p75
      %p77 = scmp.ne.s32.totalorder %s66, %s67
      %p78 = scmp.eq.s32.totalorder %s20, 0
      %p79 = por %p77, %p78
      %p80 = scmp.ne.s32.totalorder %s66, %s67
      %p81 = scmp.eq.s32.totalorder %s21, 1
      %p82 = por %p80, %p81
      %p84 = scmp.ne.s32.totalorder %s67, %s83
      %p85 = scmp.eq.s32.totalorder %s21, 0
      %p86 = por %p84, %p85
      %s87 = ssub.s32 %s23, %s30
      %p88 = scmp.eq.s32.totalorder %s87, 0
      %s90 = sadd.s32 %s89, 1
      %s91 = scalar_select %p88, %s89, %s90
      %p94 = pneg %p88
      %p95 = scmp.eq.s32.totalorder %s15, 1
      %p96 = por %p94, %p95
      %p97 = scmp.ne.s32.totalorder %s89, %s92
      %p98 = scmp.eq.s32.totalorder %s15, 0
      %p99 = por %p97, %p98
      %p100 = scmp.ne.s32.totalorder %s89, %s92
      %p101 = scmp.eq.s32.totalorder %s20, 1
      %p102 = por %p100, %p101
      %p103 = scmp.ne.s32.totalorder %s92, %s93
      %p104 = scmp.eq.s32.totalorder %s20, 0
      %p105 = por %p103, %p104
      %p106 = scmp.ne.s32.totalorder %s92, %s93
      %p107 = scmp.eq.s32.totalorder %s21, 1
      %p108 = por %p106, %p107
      %p110 = scmp.ne.s32.totalorder %s93, %s109
      %p111 = scmp.eq.s32.totalorder %s21, 0
      %p112 = por %p110, %p111
      %s113 = ssub.s32 %s22, %s34
      %s114 = ssub.s32 %s23, %s30
      %s115 = sor.u32 %s113, %s114
      %p116 = scmp.eq.s32.totalorder %s115, 0
      %s118 = sadd.s32 %s117, 1
      %s119 = scalar_select %p116, %s117, %s118
      %p122 = pneg %p116
      %p123 = scmp.eq.s32.totalorder %s15, 1
      %p124 = por %p122, %p123
      %p125 = scmp.ne.s32.totalorder %s117, %s120
      %p126 = scmp.eq.s32.totalorder %s15, 0
      %p127 = por %p125, %p126
      %p128 = scmp.ne.s32.totalorder %s117, %s120
      %p129 = scmp.eq.s32.totalorder %s20, 1
      %p130 = por %p128, %p129
      %p131 = scmp.ne.s32.totalorder %s120, %s121
      %p132 = scmp.eq.s32.totalorder %s20, 0
      %p133 = por %p131, %p132
      %p134 = scmp.ne.s32.totalorder %s120, %s121
      %p135 = scmp.eq.s32.totalorder %s21, 1
      %p136 = por %p134, %p135
      %p138 = scmp.ne.s32.totalorder %s121, %s137
      %p139 = scmp.eq.s32.totalorder %s21, 0
      %p140 = por %p138, %p139
      %p141 = scmp.le.s32.totalorder 1, %s15
      %p142 = scmp.lt.s32.totalorder %s15, 3
      %p143 = pnand %p141, %p142
      %p144 = pneg %p143
      // Predicated region
      $region9: #{tpu_custom_call.1} parent=5 // pred_check
        _
      $region10: #{tpu_custom_call.1} parent=5 // pred_check_branch
        %146 = sbr.rel (%p143) target = $region12
      $region11: #{tpu_custom_call.1} parent=5 // pred_region
        %s147 = ssub.s32 %s15, 1
        // Predicated region
        $region13: #{tpu_custom_call.1} parent=11 // pred_check
          %p148 = pneg %p79
        $region14: #{tpu_custom_call.1} parent=11 // pred_check_branch
          %150 = sbr.rel (%p148) target = $region16
        $region15: #{tpu_custom_call.1} parent=11 // pred_region
          %p151 = scmp.lt.s32.totalorder %s25, 0
          %s152 = scalar_select %p151, %s25, 0
          %s153 = smul.addr %s152, 8
          %s154 = scalar_lea.vmem %s1, %s153
        $region16: #{tpu_custom_call.1} parent=11 // pred_fallthru
          _
        // Predicated region
        $region17: #{tpu_custom_call.1} parent=11 // pred_check
          %p155 = pneg %p105
        $region18: #{tpu_custom_call.1} parent=11 // pred_check_branch
          %157 = sbr.rel (%p155) target = $region20
        $region19: #{tpu_custom_call.1} parent=11 // pred_region
          %p158 = scmp.lt.s32.totalorder %s25, 0
          %s159 = scalar_select %p158, %s25, 0
          %s160 = smul.addr %s159, 8
          %s161 = scalar_lea.vmem %s2, %s160
        $region20: #{tpu_custom_call.1} parent=11 // pred_fallthru
          _
      $region12: #{tpu_custom_call.1} parent=5 // pred_fallthru
        _
      %p162 = scmp.lt.s32.totalorder %s15, 2
      // Predicated region
      $region21: #{tpu_custom_call.1} parent=5 // pred_check
        %p163 = pneg %p162
      $region22: #{tpu_custom_call.1} parent=5 // pred_check_branch
        %165 = sbr.rel (%p163) target = $region24
      $region23: #{tpu_custom_call.1} parent=5 // pred_region
        // Predicated region
        $region25: #{tpu_custom_call.1} parent=23 // pred_check
          %p166 = pneg %p47
        $region26: #{tpu_custom_call.1} parent=23 // pred_check_branch
          %168 = sbr.rel (%p166) target = $region28
        $region27: #{tpu_custom_call.1} parent=23 // pred_region
          %s169 = sand.u32 %s37, 1
          %s170 = scalar_lea.sflag [#allocation4], %s169
          %s171 = sand.u32 %s37, 1
          %s172 = smul.addr %s171, 16
          %s173 = scalar_lea.vmem [#allocation3], %s172
          %s175 = ssub.s32 256, 256
          %176 = vsyncadd %s170, %s175
          %s177 = smul.addr %s22, 4
          %s178 = smul.addr %s177, 64
          %s179 = scalar_lea.hbm %s0, %s178
          %s181 = sshll.u32 %s173, 4
          %s182 = int_to_ptr.vmem [resolvable:$true] %s181
          %184 = dma.hbm_to_vmem [thread:$0]  %s179, 256, %s182, %s170
        $region28: #{tpu_custom_call.1} parent=23 // pred_fallthru
          _
      $region24: #{tpu_custom_call.1} parent=5 // pred_fallthru
        _
      %p185 = scmp.le.s32.totalorder 1, %s15
      %p186 = scmp.lt.s32.totalorder %s15, 3
      %p187 = pnand %p185, %p186
      %p188 = pneg %p187
      // Predicated region
      $region29: #{tpu_custom_call.1} parent=5 // pred_check
        _
      $region30: #{tpu_custom_call.1} parent=5 // pred_check_branch
        %190 = sbr.rel (%p187) target = $region32
      $region31: #{tpu_custom_call.1} parent=5 // pred_region
        %s191 = ssub.s32 %s15, 1
        %s192 = sand.u32 %s40, 1
        %s193 = scalar_lea.sflag [#allocation4], %s192
        %s194 = sand.u32 %s40, 1
        %s195 = smul.addr %s194, 16
        %s196 = scalar_lea.vmem [#allocation3], %s195
        // Predicated region
        $region33: #{tpu_custom_call.1} parent=31 // pred_check
          %p197 = pneg %p53
        $region34: #{tpu_custom_call.1} parent=31 // pred_check_branch
          %199 = sbr.rel (%p197) target = $region36
        $region35: #{tpu_custom_call.1} parent=31 // pred_region
          %200 = dma.done %s193, 256
        $region36: #{tpu_custom_call.1} parent=31 // pred_fallthru
          _
        %s201 = sand.u32 %s40, 1
        %s202 = scalar_lea.sflag [#allocation4], %s201
        %s203 = sand.u32 %s40, 1
        %s204 = smul.addr %s203, 16
        %s205 = scalar_lea.vmem [#allocation3], %s204
        %p206 = pneg %p53
        %p207 = pneg %p50
        %p208 = scmp.lt.s32.totalorder %s25, 0
        %s209 = scalar_select %p208, %s25, 0
        %s210 = smul.addr %s209, 8
        %s211 = scalar_lea.vmem %s1, %s210
        %p212 = pneg %p79
        %p213 = pneg %p76
        %p214 = scmp.lt.s32.totalorder %s25, 0
        %s215 = scalar_select %p214, %s25, 0
        %s216 = smul.addr %s215, 8
        %s217 = scalar_lea.vmem %s2, %s216
        %p218 = pneg %p105
        %p219 = pneg %p102
        %p220 = pneg %p133
        %p221 = pneg %p130
        %s222 = sand.u32 %s120, 1
        %s223 = scalar_lea.sflag [#allocation5], %s222
        %s224 = sand.u32 %s120, 1
        %s225 = smul.addr %s224, 24
        %s226 = scalar_lea.vmem [#allocation6], %s225
        %p227 = scmp.lt.s32.totalorder %s25, 0
        %s228 = scalar_select %p227, %s25, 0
        %s229 = smul.addr %s228, 8
        %s230 = scalar_lea.vmem %s1, %s229
        %p231 = scmp.lt.s32.totalorder %s25, 0
        %s232 = scalar_select %p231, %s25, 0
        %s233 = smul.addr %s232, 8
        %s234 = scalar_lea.vmem %s2, %s233
        %p235 = scmp.eq.s32.totalorder %s25, 0
        // Predicated region
        $region37: #{tpu_custom_call.1} parent=31 // pred_check
          %p236 = pneg %p235
        $region38: #{tpu_custom_call.1} parent=31 // pred_check_branch
          %238 = sbr.rel (%p236) target = $region40
        $region39: #{tpu_custom_call.1} parent=31 // pred_region
          %v239 = vld [vmem:[%s196] sm:$0xff]
          %v240 = vld [vmem:[%s196 + $0x8] sm:$0xf]
          %v242 = vcombine.high %v239, %v239
          %244 = vst [vmem:[#allocation2] sm:$0xf] %v239
          %245 = vst [vmem:[#allocation2 + $0x8] sm:$0xf] %v242
          %246 = vst [vmem:[#allocation2 + $0x10] sm:$0xf] %v240
          %v247 = vld [vmem:[%s196] sm:$0xff]
          %v248 = vld [vmem:[%s196 + $0x8] sm:$0xff]
          %v251 = vcombine.low %v247, %v247
          %v252 = vcombine.low %v248, %v248
          %253 = vrot.lane.b32.xlu0 %v251, 127
          %v254 = vpop.permute.xlu0 %253
          %255 = vrot.lane.b32.xlu0 %v247, 127
          %v256 = vpop.permute.xlu0 %255
          %257 = vrot.lane.b32.xlu0 %v252, 127
          %v258 = vpop.permute.xlu0 %257
          %259 = vrot.lane.b32.xlu0 %v248, 127
          %v260 = vpop.permute.xlu0 %259
          %vm261 = vcmask 1039360
          %v262 = vsel %vm261, %v254, %v256
          %v263 = vsel %vm261, %v256, %v258
          %v264 = vsel %vm261, %v258, %v260
          %268 = vst [vmem:[#allocation2] sm:$0xf0] %v262
          %269 = vst [vmem:[#allocation2 + $0x8] sm:$0xf0] %v263
          %270 = vst [vmem:[#allocation2 + $0x10] sm:$0xf0] %v264
          %v271 = vld [vmem:[%s196] sm:$0xff]
          %v272 = vld [vmem:[%s196 + $0x8] sm:$0xff]
          %v275 = vcombine.high %v271, %v271
          %v276 = vcombine.high %v272, %v272
          %277 = vrot.lane.b32.xlu0 %v271, 126
          %v278 = vpop.permute.xlu0 %277
          %279 = vrot.lane.b32.xlu0 %v275, 126
          %v280 = vpop.permute.xlu0 %279
          %281 = vrot.lane.b32.xlu0 %v272, 126
          %v282 = vpop.permute.xlu0 %281
          %283 = vrot.lane.b32.xlu0 %v276, 126
          %v284 = vpop.permute.xlu0 %283
          %vm285 = vcmask 1031168
          %v286 = vsel %vm285, %v278, %v280
          %v287 = vsel %vm285, %v280, %v282
          %v288 = vsel %vm285, %v282, %v284
          %292 = vst [vmem:[#allocation2 + $0x18] sm:$0xf] %v286
          %293 = vst [vmem:[#allocation2 + $0x20] sm:$0xf] %v287
          %294 = vst [vmem:[#allocation2 + $0x28] sm:$0xf] %v288
          %v295 = vld [vmem:[%s196] sm:$0xff]
          %v296 = vld [vmem:[%s196 + $0x8] sm:$0xff]
          %v299 = vcombine.low %v295, %v295
          %v300 = vcombine.low %v296, %v296
          %301 = vrot.lane.b32.xlu0 %v299, 110
          %v302 = vpop.permute.xlu0 %301
          %303 = vrot.lane.b32.xlu0 %v295, 110
          %v304 = vpop.permute.xlu0 %303
          %305 = vrot.lane.b32.xlu0 %v300, 110
          %v306 = vpop.permute.xlu0 %305
          %307 = vrot.lane.b32.xlu0 %v296, 110
          %v308 = vpop.permute.xlu0 %307
          %vm309 = vcmask 900096
          %v310 = vsel %vm309, %v302, %v304
          %v311 = vsel %vm309, %v304, %v306
          %v312 = vsel %vm309, %v306, %v308
          %316 = vst [vmem:[#allocation2 + $0x18] sm:$0xf0] %v310
          %317 = vst [vmem:[#allocation2 + $0x20] sm:$0xf0] %v311
          %318 = vst [vmem:[#allocation2 + $0x28] sm:$0xf0] %v312
          %v319 = vld [vmem:[%s196] sm:$0xff]
          %v320 = vld [vmem:[%s196 + $0x8] sm:$0xff]
          %v323 = vcombine.high %v319, %v319
          %v324 = vcombine.high %v320, %v320
          %325 = vrot.lane.b32.xlu0 %v319, 109
          %v326 = vpop.permute.xlu0 %325
          %327 = vrot.lane.b32.xlu0 %v323, 109
          %v328 = vpop.permute.xlu0 %327
          %329 = vrot.lane.b32.xlu0 %v320, 109
          %v330 = vpop.permute.xlu0 %329
          %331 = vrot.lane.b32.xlu0 %v324, 109
          %v332 = vpop.permute.xlu0 %331
          %vm333 = vcmask 891904
          %v334 = vsel %vm333, %v326, %v328
          %v335 = vsel %vm333, %v328, %v330
          %v336 = vsel %vm333, %v330, %v332
          %340 = vst [vmem:[#allocation2 + $0x30] sm:$0xf] %v334
          %341 = vst [vmem:[#allocation2 + $0x38] sm:$0xf] %v335
          %342 = vst [vmem:[#allocation2 + $0x40] sm:$0xf] %v336
          %v343 = vld [vmem:[%s196] sm:$0xff]
          %v344 = vld [vmem:[%s196 + $0x8] sm:$0xff]
          %v347 = vcombine.low %v343, %v343
          %v348 = vcombine.low %v344, %v344
          %349 = vrot.lane.b32.xlu0 %v347, 108
          %v350 = vpop.permute.xlu0 %349
          %351 = vrot.lane.b32.xlu0 %v343, 108
          %v352 = vpop.permute.xlu0 %351
          %353 = vrot.lane.b32.xlu0 %v348, 108
          %v354 = vpop.permute.xlu0 %353
          %355 = vrot.lane.b32.xlu0 %v344, 108
          %v356 = vpop.permute.xlu0 %355
          %vm357 = vcmask 883712
          %v358 = vsel %vm357, %v350, %v352
          %v359 = vsel %vm357, %v352, %v354
          %v360 = vsel %vm357, %v354, %v356
          %364 = vst [vmem:[#allocation2 + $0x30] sm:$0xf0] %v358
          %365 = vst [vmem:[#allocation2 + $0x38] sm:$0xf0] %v359
          %366 = vst [vmem:[#allocation2 + $0x40] sm:$0xf0] %v360
          %v367 = vld [vmem:[%s196] sm:$0xff]
          %v368 = vld [vmem:[%s196 + $0x8] sm:$0xff]
          %v371 = vcombine.high %v367, %v367
          %v372 = vcombine.high %v368, %v368
          %373 = vrot.lane.b32.xlu0 %v367, 92
          %v374 = vpop.permute.xlu0 %373
          %375 = vrot.lane.b32.xlu0 %v371, 92
          %v376 = vpop.permute.xlu0 %375
          %377 = vrot.lane.b32.xlu0 %v368, 92
          %v378 = vpop.permute.xlu0 %377
          %379 = vrot.lane.b32.xlu0 %v372, 92
          %v380 = vpop.permute.xlu0 %379
          %vm381 = vcmask 752640
          %v382 = vsel %vm381, %v374, %v376
          %v383 = vsel %vm381, %v376, %v378
          %v384 = vsel %vm381, %v378, %v380
          %388 = vst [vmem:[#allocation2 + $0x48] sm:$0xf] %v382
          %389 = vst [vmem:[#allocation2 + $0x50] sm:$0xf] %v383
          %390 = vst [vmem:[#allocation2 + $0x58] sm:$0xf] %v384
          %v391 = vld [vmem:[%s196] sm:$0xff]
          %v392 = vld [vmem:[%s196 + $0x8] sm:$0xff]
          %v395 = vcombine.low %v391, %v391
          %v396 = vcombine.low %v392, %v392
          %397 = vrot.lane.b32.xlu0 %v395, 91
          %v398 = vpop.permute.xlu0 %397
          %399 = vrot.lane.b32.xlu0 %v391, 91
          %v400 = vpop.permute.xlu0 %399
          %401 = vrot.lane.b32.xlu0 %v396, 91
          %v402 = vpop.permute.xlu0 %401
          %403 = vrot.lane.b32.xlu0 %v392, 91
          %v404 = vpop.permute.xlu0 %403
          %vm405 = vcmask 744448
          %v406 = vsel %vm405, %v398, %v400
          %v407 = vsel %vm405, %v400, %v402
          %v408 = vsel %vm405, %v402, %v404
          %412 = vst [vmem:[#allocation2 + $0x48] sm:$0xf0] %v406
          %413 = vst [vmem:[#allocation2 + $0x50] sm:$0xf0] %v407
          %414 = vst [vmem:[#allocation2 + $0x58] sm:$0xf0] %v408
          %v415 = vld [vmem:[%s196] sm:$0xff]
          %v416 = vld [vmem:[%s196 + $0x8] sm:$0xff]
          %v419 = vcombine.high %v415, %v415
          %v420 = vcombine.high %v416, %v416
          %421 = vrot.lane.b32.xlu0 %v415, 90
          %v422 = vpop.permute.xlu0 %421
          %423 = vrot.lane.b32.xlu0 %v419, 90
          %v424 = vpop.permute.xlu0 %423
          %425 = vrot.lane.b32.xlu0 %v416, 90
          %v426 = vpop.permute.xlu0 %425
          %427 = vrot.lane.b32.xlu0 %v420, 90
          %v428 = vpop.permute.xlu0 %427
          %vm429 = vcmask 736256
          %v430 = vsel %vm429, %v422, %v424
          %v431 = vsel %vm429, %v424, %v426
          %v432 = vsel %vm429, %v426, %v428
          %436 = vst [vmem:[#allocation2 + $0x60] sm:$0xf] %v430
          %437 = vst [vmem:[#allocation2 + $0x68] sm:$0xf] %v431
          %438 = vst [vmem:[#allocation2 + $0x70] sm:$0xf] %v432
        $region40: #{tpu_custom_call.1} parent=31 // pred_fallthru
          _
        %v439 = vld [vmem:[%s230] sm:$0xff]
        %v440 = vld [vmem:[#allocation2] sm:$0xff]
        %v441 = vld [vmem:[#allocation2 + $0x8] sm:$0xff]
        %v442 = vld [vmem:[#allocation2 + $0x10] sm:$0xff]
        %v443 = vld [vmem:[#allocation2 + $0x18] sm:$0xff]
        %v444 = vld [vmem:[#allocation2 + $0x20] sm:$0xff]
        %v445 = vld [vmem:[#allocation2 + $0x28] sm:$0xff]
        %v446 = vld [vmem:[#allocation2 + $0x30] sm:$0xff]
        %v447 = vld [vmem:[#allocation2 + $0x38] sm:$0xff]
        %v448 = vld [vmem:[#allocation2 + $0x40] sm:$0xff]
        %v449 = vld [vmem:[#allocation2 + $0x48] sm:$0xff]
        %v450 = vld [vmem:[#allocation2 + $0x50] sm:$0xff]
        %v451 = vld [vmem:[#allocation2 + $0x58] sm:$0xff]
        %v452 = vld [vmem:[#allocation2 + $0x60] sm:$0xf]
        %v453 = vld [vmem:[#allocation2 + $0x68] sm:$0xf]
        %v454 = vld [vmem:[#allocation2 + $0x70] sm:$0xf]
        %v455 = vld [vmem:[%s234] sm:$0xff]
        %457 = vset.pattern.permute.xlu0 0
        %458 = vperm.xlu0 %457, %v455
        %v459 = vpop.permute.xlu0 %458
        %vm461 = vcmask 293888
        %v463 = vsel %vm461, %v439, 0
        %vm465 = vcmask 1043456
        %v467 = vsel %vm465, %v452, 0
        %v470 = vsel %vm465, %v453, 0
        %v473 = vsel %vm465, %v454, 0
        %475 = vmatprep.subr.mxu0 0.0
        %476 = vmatpush1.msra.mxu0 0.0
        %477 = vmatprep.subr.mxu0 0.0
        %478 = vmatpush1.msra.mxu0 0.0
        %479 = vmatprep.subr.mxu0 0.0
        %480 = vmatpush1.msra.mxu0 0.0
        %481 = vmatprep.subr.mxu0 0.0
        %482 = vmatpush1.msra.mxu0 0.0
        %483 = vmatprep.subr.mxu0 0.0
        %484 = vmatpush1.msra.mxu0 0.0
        %485 = vmatprep.subr.mxu0 0.0
        %486 = vmatpush1.msra.mxu0 0.0
        %487 = vmatprep.subr.mxu0 0.0
        %488 = vmatpush1.msra.mxu0 0.0
        %489 = vmatprep.subr.mxu0 0.0
        %490 = vmatpush1.msra.mxu0 0.0
        %491 = vmatprep.subr.mxu0 0.0
        %492 = vmatpush1.msra.mxu0 0.0
        %493 = vmatprep.subr.mxu0 0.0
        %494 = vmatpush1.msra.mxu0 0.0
        %495 = vmatprep.subr.mxu0 0.0
        %496 = vmatpush1.msra.mxu0 0.0
        %497 = vmatprep.subr.mxu0 %v470
        %498 = vmatpush1.msra.mxu0 %v467
        %499 = vmatprep.subr.mxu0 %v450
        %500 = vmatpush1.msra.mxu0 %v449
        %501 = vmatprep.subr.mxu0 %v447
        %502 = vmatpush1.msra.mxu0 %v446
        %503 = vmatprep.subr.mxu0 %v444
        %504 = vmatpush1.msra.mxu0 %v443
        %505 = vmatprep.subr.mxu0 %v441
        %506 = vmatpush1.msra.mxu0 %v440
        %507 = vmatprep.subr.mxu0 0.0
        %508 = vmatpush2.msra.mxu0 0.0
        %509 = vmatprep.subr.mxu0 0.0
        %510 = vmatpush2.msra.mxu0 0.0
        %511 = vmatprep.subr.mxu0 0.0
        %512 = vmatpush2.msra.mxu0 0.0
        %513 = vmatprep.subr.mxu0 0.0
        %514 = vmatpush2.msra.mxu0 0.0
        %515 = vmatprep.subr.mxu0 0.0
        %516 = vmatpush2.msra.mxu0 0.0
        %517 = vmatprep.subr.mxu0 0.0
        %518 = vmatpush2.msra.mxu0 0.0
        %519 = vmatprep.subr.mxu0 0.0
        %520 = vmatpush2.msra.mxu0 0.0
        %521 = vmatprep.subr.mxu0 0.0
        %522 = vmatpush2.msra.mxu0 0.0
        %523 = vmatprep.subr.mxu0 0.0
        %524 = vmatpush2.msra.mxu0 0.0
        %525 = vmatprep.subr.mxu0 0.0
        %526 = vmatpush2.msra.mxu0 0.0
        %527 = vmatprep.subr.mxu0 0.0
        %528 = vmatpush2.msra.mxu0 0.0
        %529 = vmatprep.subr.mxu0 0.0
        %530 = vmatpush2.msra.mxu0 0.0
        %531 = vmatprep.subr.mxu0 0.0
        %532 = vmatpush2.msra.mxu0 0.0
        %533 = vmatprep.subr.mxu0 0.0
        %534 = vmatpush2.msra.mxu0 0.0
        %535 = vmatprep.subr.mxu0 0.0
        %536 = vmatpush2.msra.mxu0 0.0
        %537 = vmatprep.subr.mxu0 0.0
        %538 = vmatpush2.msra.mxu0 0.0
        %539 = vmatprep.mubr.f32.mxu0 0.0
        %540 = vmatmul.mubr.f32.gmra.mxu0 %v463
        %v541 = vpop.f32.mrf.mxu0
        %v542 = vadd.f32 %v459, %v541
        %v543 = vpop.f32.mrf.mxu0
        %v544 = vadd.f32 %v459, %v543
        %545 = vdwg.mxu0
        %546 = vmatprep.subr.mxu0 0.0
        %547 = vmatpush1.msra.mxu0 0.0
        %548 = vmatprep.subr.mxu0 0.0
        %549 = vmatpush1.msra.mxu0 0.0
        %550 = vmatprep.subr.mxu0 0.0
        %551 = vmatpush1.msra.mxu0 0.0
        %552 = vmatprep.subr.mxu0 0.0
        %553 = vmatpush1.msra.mxu0 0.0
        %554 = vmatprep.subr.mxu0 0.0
        %555 = vmatpush1.msra.mxu0 0.0
        %556 = vmatprep.subr.mxu0 0.0
        %557 = vmatpush1.msra.mxu0 0.0
        %558 = vmatprep.subr.mxu0 0.0
        %559 = vmatpush1.msra.mxu0 0.0
        %560 = vmatprep.subr.mxu0 0.0
        %561 = vmatpush1.msra.mxu0 0.0
        %562 = vmatprep.subr.mxu0 0.0
        %563 = vmatpush1.msra.mxu0 0.0
        %564 = vmatprep.subr.mxu0 0.0
        %565 = vmatpush1.msra.mxu0 0.0
        %566 = vmatprep.subr.mxu0 0.0
        %567 = vmatpush1.msra.mxu0 0.0
        %568 = vmatprep.subr.mxu0 0.0
        %569 = vmatpush1.msra.mxu0 %v473
        %570 = vmatprep.subr.mxu0 0.0
        %571 = vmatpush1.msra.mxu0 %v451
        %572 = vmatprep.subr.mxu0 0.0
        %573 = vmatpush1.msra.mxu0 %v448
        %574 = vmatprep.subr.mxu0 0.0
        %575 = vmatpush1.msra.mxu0 %v445
        %576 = vmatprep.subr.mxu0 0.0
        %577 = vmatpush1.msra.mxu0 %v442
        %578 = vmatprep.subr.mxu0 0.0
        %579 = vmatpush2.msra.mxu0 0.0
        %580 = vmatprep.subr.mxu0 0.0
        %581 = vmatpush2.msra.mxu0 0.0
        %582 = vmatprep.subr.mxu0 0.0
        %583 = vmatpush2.msra.mxu0 0.0
        %584 = vmatprep.subr.mxu0 0.0
        %585 = vmatpush2.msra.mxu0 0.0
        %586 = vmatprep.subr.mxu0 0.0
        %587 = vmatpush2.msra.mxu0 0.0
        %588 = vmatprep.subr.mxu0 0.0
        %589 = vmatpush2.msra.mxu0 0.0
        %590 = vmatprep.subr.mxu0 0.0
        %591 = vmatpush2.msra.mxu0 0.0
        %592 = vmatprep.subr.mxu0 0.0
        %593 = vmatpush2.msra.mxu0 0.0
        %594 = vmatprep.subr.mxu0 0.0
        %595 = vmatpush2.msra.mxu0 0.0
        %596 = vmatprep.subr.mxu0 0.0
        %597 = vmatpush2.msra.mxu0 0.0
        %598 = vmatprep.subr.mxu0 0.0
        %599 = vmatpush2.msra.mxu0 0.0
        %600 = vmatprep.subr.mxu0 0.0
        %601 = vmatpush2.msra.mxu0 0.0
        %602 = vmatprep.subr.mxu0 0.0
        %603 = vmatpush2.msra.mxu0 0.0
        %604 = vmatprep.subr.mxu0 0.0
        %605 = vmatpush2.msra.mxu0 0.0
        %606 = vmatprep.subr.mxu0 0.0
        %607 = vmatpush2.msra.mxu0 0.0
        %608 = vmatprep.subr.mxu0 0.0
        %609 = vmatpush2.msra.mxu0 0.0
        %610 = vmatprep.mubr.f32.mxu0 0.0
        %611 = vmatmul.mubr.f32.gmra.mxu0 %v463
        %v612 = vpop.f32.mrf.mxu0
        %v613 = vadd.f32 %v459, %v612
        %v614 = vpop.f32.mrf.mxu0
        %615 = vdwg.mxu0
        %616 = vst [vmem:[%s226] sm:$0xff] %v542
        %617 = vst [vmem:[%s226 + $0x8] sm:$0xff] %v544
        %618 = vst [vmem:[%s226 + $0x10] sm:$0xff] %v613
        %s619 = sand.u32 %s120, 1
        %s620 = scalar_lea.sflag [#allocation5], %s619
        %s621 = sand.u32 %s120, 1
        %s622 = smul.addr %s621, 24
        %s623 = scalar_lea.vmem [#allocation6], %s622
        // Predicated region
        $region41: #{tpu_custom_call.1} parent=31 // pred_check
          %p624 = pneg %p130
        $region42: #{tpu_custom_call.1} parent=31 // pred_check_branch
          %626 = sbr.rel (%p624) target = $region44
        $region43: #{tpu_custom_call.1} parent=31 // pred_region
          %s628 = ssub.s32 384, 384
          %629 = vsyncadd %s620, %s628
          %s630 = smul.addr %s25, 3
          %s631 = smul.addr %s24, 3
          %s632 = sadd.s32 %s630, %s631
          %s633 = smul.addr %s632, 128
          %s634 = scalar_lea.hbm %s3, %s633
          %s636 = sshll.u32 %s623, 4
          %s637 = int_to_ptr.vmem [resolvable:$true] %s636
          %639 = dma.vmem_to_hbm [thread:$0]  %s637, 384, %s634, %s620
        $region44: #{tpu_custom_call.1} parent=31 // pred_fallthru
          _
      $region32: #{tpu_custom_call.1} parent=5 // pred_fallthru
        _
      %p640 = scmp.le.s32.totalorder 2, %s15
      // Predicated region
      $region45: #{tpu_custom_call.1} parent=5 // pred_check
        %p641 = pneg %p640
      $region46: #{tpu_custom_call.1} parent=5 // pred_check_branch
        %643 = sbr.rel (%p641) target = $region48
      $region47: #{tpu_custom_call.1} parent=5 // pred_region
        %s644 = ssub.s32 %s15, 2
        // Predicated region
        $region49: #{tpu_custom_call.1} parent=47 // pred_check
          %p645 = pneg %p136
        $region50: #{tpu_custom_call.1} parent=47 // pred_check_branch
          %647 = sbr.rel (%p645) target = $region52
        $region51: #{tpu_custom_call.1} parent=47 // pred_region
          %s648 = sand.u32 %s121, 1
          %s649 = scalar_lea.sflag [#allocation5], %s648
          %s650 = sand.u32 %s121, 1
          %s651 = smul.addr %s650, 24
          %s652 = scalar_lea.vmem [#allocation6], %s651
          %653 = dma.done %s649, 384
        $region52: #{tpu_custom_call.1} parent=47 // pred_fallthru
          _
      $region48: #{tpu_custom_call.1} parent=5 // pred_fallthru
        _
    $region6: #{tpu_custom_call.1} parent=1 // loop_footer
      %s19 = sadd.s32 1, %s15
    $region7: #{tpu_custom_call.1} parent=1 // loop_footer_branch
      %14 = sbr.rel target = $region3
    $region8: #{tpu_custom_call.1} parent=1 // loop_exit
      _
    %654 = vsyncpa [#allocation4], 1
    %s655 = scalar_lea.sflag [#allocation4], 1
    %656 = vsyncpa %s655, 1
    %657 = vsyncpa [#allocation5], 1
    %s658 = scalar_lea.sflag [#allocation5], 1
    %659 = vsyncpa %s658, 1

</llo_original>
